<compile_context>
chip_gen: v7x
topology: tpu7x:2x2x1
jax: 0.10.0
libtpu: 0.0.40
codegen_flags: <defaults>
</compile_context>

<pallas_src>
import functools

import jax
import jax.numpy as jnp
from jax.experimental import pallas as pl
from jax.experimental.pallas import tpu as pltpu

LANE = 128  # TPU lane width: pad last dims to this for unmasked stores / MXU use.


def _round_up(x, m):
    return ((x + m - 1) // m) * m


# ----------------------------------------------------------------------------
# Fused kernel: linear embed -> cosine similarity -> softmax(dim=support)
#               -> attention @ one_hot(y_support) -> mean cross-entropy
# ----------------------------------------------------------------------------
def _matchnet_kernel(xs_ref, xq_ref, w_ref, b_ref, ys_ref, yq_ref,
                     logits_ref, loss_ref, *, num_query, num_ways):
    eps = 1e-8

    # ---- linear backbone: weights stay VMEM-resident, two MXU dots ----------
    w = w_ref[...]                                          # [FPAD, DPAD]
    b = b_ref[...]                                          # [1, DPAD]
    s = jnp.dot(xs_ref[...], w, preferred_element_type=jnp.float32) + b  # [S, DPAD]
    q = jnp.dot(xq_ref[...], w, preferred_element_type=jnp.float32) + b  # [Q, DPAD]

    # ---- cosine similarity: normalize rows first (EUP rsqrt, no XLU transpose)
    # Padding columns of w/b are zero, so norms and dot products are exact.
    s_n = s * jax.lax.rsqrt(
        jnp.maximum(jnp.sum(s * s, axis=-1, keepdims=True), eps * eps))
    q_n = q * jax.lax.rsqrt(
        jnp.maximum(jnp.sum(q * q, axis=-1, keepdims=True), eps * eps))
    cos = jax.lax.dot_general(                              # NT contraction over D
        q_n, s_n, dimension_numbers=(((1,), (1,)), ((), ())),
        preferred_element_type=jnp.float32)                 # [Q, S]

    # ---- softmax over dim=1 (the support axis) -------------------------------
    m = jnp.max(cos, axis=1, keepdims=True)
    e = jnp.exp(cos - m)
    attn = e / jnp.sum(e, axis=1, keepdims=True)            # exact divide (tiny)

    # ---- logits = attention @ one_hot(y_support); one-hot built in-kernel ----
    # F.one_hot infers num_classes = max(label)+1; labels cover all num_ways
    # classes, so comparing against a lane iota (zero-padded to 128) is equivalent.
    S = ys_ref.shape[0]
    NPAD = logits_ref.shape[1]
    col_s = jax.lax.broadcasted_iota(jnp.int32, (S, NPAD), 1)
    onehot_s = (col_s == ys_ref[...]).astype(jnp.float32)   # [S, NPAD]
    logits = jnp.dot(attn, onehot_s, preferred_element_type=jnp.float32)  # [Q, NPAD]
    logits_ref[...] = logits                                 # lane-dense store

    # ---- cross-entropy (mean) over the real num_ways classes -----------------
    Q = yq_ref.shape[0]
    col_q = jax.lax.broadcasted_iota(jnp.int32, (Q, NPAD), 1)
    # Padded classes masked with f32 min: exp(min - lmax) underflows cleanly to 0.
    masked = jnp.where(col_q < num_ways, logits, jnp.finfo(jnp.float32).min)
    lmax = jnp.max(masked, axis=-1, keepdims=True)
    lse = jnp.log(jnp.sum(jnp.exp(masked - lmax), axis=-1, keepdims=True)) + lmax
    onehot_q = (col_q == yq_ref[...]).astype(jnp.float32)    # [Q, NPAD]
    picked = jnp.sum(logits * onehot_q, axis=-1, keepdims=True)   # [Q, 1]
    loss_ref[0, 0] = jnp.sum(lse - picked) * (1.0 / num_query)


# ----------------------------------------------------------------------------
# MatchNet forward (glue in plain JAX)
# ----------------------------------------------------------------------------
def matchnet_forward(params, x_support, x_query, y_support, y_query, num_ways):
    S = x_support.shape[0]
    Q = x_query.shape[0]
    D = params["w"].shape[1]

    xs = x_support.reshape(S, -1).astype(jnp.float32)
    xq = x_query.reshape(Q, -1).astype(jnp.float32)
    F = xs.shape[1]

    # Explicit lane-alignment invariant: pad F and D to 128-lane multiples with
    # zeros (zero columns in x, zero rows/cols in w), and num_ways to a full
    # 128-lane logits tile.  (S and Q here are already multiples of 8 sublanes.)
    FPAD = _round_up(F, LANE)
    DPAD = _round_up(D, LANE)
    NPAD = _round_up(num_ways, LANE)

    if FPAD != F:
        xs = jnp.pad(xs, ((0, 0), (0, FPAD - F)))
        xq = jnp.pad(xq, ((0, 0), (0, FPAD - F)))
    w_pad = jnp.pad(params["w"].astype(jnp.float32),
                    ((0, FPAD - F), (0, DPAD - D)))
    b_pad = jnp.pad(params["b"].astype(jnp.float32), (0, DPAD - D)).reshape(1, DPAD)

    # Labels go in as tiny int32 columns; one-hots are materialized in-kernel.
    ys = y_support.astype(jnp.int32).reshape(S, 1)
    yq = y_query.astype(jnp.int32).reshape(Q, 1)

    kernel = functools.partial(_matchnet_kernel, num_query=Q, num_ways=num_ways)

    logits_pad, loss = pl.pallas_call(
        kernel,
        out_shape=(
            jax.ShapeDtypeStruct((Q, NPAD), jnp.float32),   # lane-dense logits
            jax.ShapeDtypeStruct((1, 1), jnp.float32),      # scalar loss (SMEM)
        ),
        in_specs=[pl.BlockSpec(memory_space=pltpu.MemorySpace.VMEM)] * 6,
        out_specs=(
            pl.BlockSpec(memory_space=pltpu.MemorySpace.VMEM),
            pl.BlockSpec(memory_space=pltpu.MemorySpace.SMEM),
        ),
    )(xs, xq, w_pad, b_pad, ys, yq)

    return loss[0, 0], logits_pad[:, :num_ways]


# ----------------------------------------------------------------------------
# Pure-JAX reference for a sanity check (HIGHEST precision so the comparison
# tests the kernel, not XLA's default bf16 matmul passes)
# ----------------------------------------------------------------------------
def matchnet_reference(params, x_support, x_query, y_support, y_query, num_ways):
    hp = jax.lax.Precision.HIGHEST
    S, Q = x_support.shape[0], x_query.shape[0]
    s = jnp.dot(x_support.reshape(S, -1), params["w"], precision=hp) + params["b"]
    q = jnp.dot(x_query.reshape(Q, -1), params["w"], precision=hp) + params["b"]
    eps = 1e-8
    cos = jnp.dot(q, s.T, precision=hp) / jnp.maximum(
        jnp.linalg.norm(q, axis=-1, keepdims=True)
        * jnp.linalg.norm(s, axis=-1, keepdims=True).T,
        eps,
    )
    attn = jax.nn.softmax(cos, axis=1)
    logits = jnp.dot(attn, jax.nn.one_hot(y_support, num_ways, dtype=jnp.float32),
                     precision=hp)
    logp = jax.nn.log_softmax(logits, axis=-1)
    loss = -jnp.mean(jnp.take_along_axis(logp, y_query[:, None], axis=1))
    return loss, logits


if __name__ == "__main__":
    key = jax.random.PRNGKey(0)
    k_ws, k_xs, k_xq, k_b = jax.random.split(key, 4)

    # Small few-shot task: 4-way, 2-shot support, 2 queries per way.
    num_ways, shots, q_per_way = 4, 2, 2
    C, H, W = 4, 8, 8
    D = 32
    S = num_ways * shots            # 8 support rows
    Q = num_ways * q_per_way        # 8 query rows
    F = C * H * W                   # 256 flattened features

    params = {
        "w": jax.random.normal(k_ws, (F, D), dtype=jnp.float32) * 0.05,
        "b": jax.random.normal(k_b, (D,), dtype=jnp.float32) * 0.01,
    }

    x_support = jax.random.normal(k_xs, (S, C, H, W), dtype=jnp.float32)
    x_query = jax.random.normal(k_xq, (Q, C, H, W), dtype=jnp.float32)
    y_support = jnp.tile(jnp.arange(num_ways, dtype=jnp.int32), shots)    # [S]
    y_query = jnp.tile(jnp.arange(num_ways, dtype=jnp.int32), q_per_way)  # [Q]

    loss, logits = matchnet_forward(
        params, x_support, x_query, y_support, y_query, num_ways
    )
    loss = jax.block_until_ready(loss)
    logits = jax.block_until_ready(logits)

    ref_loss, ref_logits = matchnet_reference(
        params, x_support, x_query, y_support, y_query, num_ways
    )
    assert logits.shape == (Q, num_ways)
    assert jnp.allclose(logits, ref_logits, atol=1e-3, rtol=1e-3)
    assert jnp.allclose(loss, ref_loss, atol=1e-3, rtol=1e-3)

    print("KERNEL_OK")
</pallas_src>

<mosaic_0001>
module attributes {stable_mosaic.version = 11 : i64} {
  func.func @_matchnet_kernel(%arg0: memref<8x256xf32, #tpu.memory_space<vmem>>, %arg1: memref<8x256xf32, #tpu.memory_space<vmem>>, %arg2: memref<256x128xf32, #tpu.memory_space<vmem>>, %arg3: memref<1x128xf32, #tpu.memory_space<vmem>>, %arg4: memref<8x1xi32, #tpu.memory_space<vmem>>, %arg5: memref<8x1xi32, #tpu.memory_space<vmem>>, %arg6: memref<8x128xf32, #tpu.memory_space<vmem>>, %arg7: memref<1x1xf32, #tpu.memory_space<smem>>) attributes {dimension_semantics = [], scalar_prefetch = 0 : i64, scratch_operands = 0 : i64, tpu.core_type = #tpu.core_type<tc>} {
    %c0 = arith.constant 0 : index
    %c0_0 = arith.constant 0 : index
    %0 = vector.load %arg2[%c0, %c0_0] : memref<256x128xf32, #tpu.memory_space<vmem>>, vector<256x128xf32>
    %c0_1 = arith.constant 0 : index
    %c0_2 = arith.constant 0 : index
    %1 = vector.load %arg3[%c0_1, %c0_2] : memref<1x128xf32, #tpu.memory_space<vmem>>, vector<1x128xf32>
    %c0_3 = arith.constant 0 : index
    %c0_4 = arith.constant 0 : index
    %2 = vector.load %arg0[%c0_3, %c0_4] : memref<8x256xf32, #tpu.memory_space<vmem>>, vector<8x256xf32>
    %cst = arith.constant dense<0.000000e+00> : vector<8x128xf32>
    %3 = tpu.matmul %2, %0, %cst {dimension_numbers = #tpu.dot_dimension_numbers<[1], [0], [0], [1], [0, 0, 1, 1], [], []>} : vector<8x256xf32>, vector<256x128xf32>, vector<8x128xf32> -> vector<8x128xf32>
    %4 = vector.broadcast %1 : vector<1x128xf32> to vector<8x128xf32>
    %5 = arith.addf %3, %4 : vector<8x128xf32>
    %c0_5 = arith.constant 0 : index
    %c0_6 = arith.constant 0 : index
    %6 = vector.load %arg1[%c0_5, %c0_6] : memref<8x256xf32, #tpu.memory_space<vmem>>, vector<8x256xf32>
    %cst_7 = arith.constant dense<0.000000e+00> : vector<8x128xf32>
    %7 = tpu.matmul %6, %0, %cst_7 {dimension_numbers = #tpu.dot_dimension_numbers<[1], [0], [0], [1], [0, 0, 1, 1], [], []>} : vector<8x256xf32>, vector<256x128xf32>, vector<8x128xf32> -> vector<8x128xf32>
    %8 = vector.broadcast %1 : vector<1x128xf32> to vector<8x128xf32>
    %9 = arith.addf %7, %8 : vector<8x128xf32>
    %10 = arith.mulf %5, %5 : vector<8x128xf32>
    %cst_8 = arith.constant dense<0.000000e+00> : vector<8xf32>
    %11 = vector.multi_reduction <add>, %10, %cst_8 [1] : vector<8x128xf32> to vector<8xf32>
    %12 = vector.shape_cast %11 : vector<8xf32> to vector<8x1xf32>
    %cst_9 = arith.constant 1.000000e-16 : f32
    %13 = vector.broadcast %cst_9 : f32 to vector<8x1xf32>
    %14 = arith.maximumf %12, %13 : vector<8x1xf32>
    %15 = math.rsqrt %14 : vector<8x1xf32>
    %16 = vector.broadcast %15 : vector<8x1xf32> to vector<8x128xf32>
    %17 = arith.mulf %5, %16 : vector<8x128xf32>
    %18 = arith.mulf %9, %9 : vector<8x128xf32>
    %cst_10 = arith.constant dense<0.000000e+00> : vector<8xf32>
    %19 = vector.multi_reduction <add>, %18, %cst_10 [1] : vector<8x128xf32> to vector<8xf32>
    %20 = vector.shape_cast %19 : vector<8xf32> to vector<8x1xf32>
    %cst_11 = arith.constant 1.000000e-16 : f32
    %21 = vector.broadcast %cst_11 : f32 to vector<8x1xf32>
    %22 = arith.maximumf %20, %21 : vector<8x1xf32>
    %23 = math.rsqrt %22 : vector<8x1xf32>
    %24 = vector.broadcast %23 : vector<8x1xf32> to vector<8x128xf32>
    %25 = arith.mulf %9, %24 : vector<8x128xf32>
    %cst_12 = arith.constant dense<0.000000e+00> : vector<8x8xf32>
    %26 = tpu.matmul %25, %17, %cst_12 {dimension_numbers = #tpu.dot_dimension_numbers<[1], [1], [0], [0], [0, 0, 1, 0], [], []>} : vector<8x128xf32>, vector<8x128xf32>, vector<8x8xf32> -> vector<8x8xf32>
    %cst_13 = arith.constant dense<0xFF800000> : vector<8xf32>
    %27 = vector.multi_reduction <maximumf>, %26, %cst_13 [1] : vector<8x8xf32> to vector<8xf32>
    %28 = vector.shape_cast %27 : vector<8xf32> to vector<8x1xf32>
    %29 = vector.broadcast %28 : vector<8x1xf32> to vector<8x8xf32>
    %30 = arith.subf %26, %29 : vector<8x8xf32>
    %31 = math.exp %30 : vector<8x8xf32>
    %cst_14 = arith.constant dense<0.000000e+00> : vector<8xf32>
    %32 = vector.multi_reduction <add>, %31, %cst_14 [1] : vector<8x8xf32> to vector<8xf32>
    %33 = vector.shape_cast %32 : vector<8xf32> to vector<8x1xf32>
    %34 = vector.broadcast %33 : vector<8x1xf32> to vector<8x8xf32>
    %35 = arith.divf %31, %34 : vector<8x8xf32>
    %36 = tpu.iota {dimensions = array<i32: 1>} : vector<8x128xi32>
    %c0_15 = arith.constant 0 : index
    %c0_16 = arith.constant 0 : index
    %37 = vector.load %arg4[%c0_15, %c0_16] : memref<8x1xi32, #tpu.memory_space<vmem>>, vector<8x1xi32>
    %38 = vector.broadcast %37 : vector<8x1xi32> to vector<8x128xi32>
    %39 = arith.cmpi eq, %36, %38 : vector<8x128xi32>
    %40 = arith.extui %39 : vector<8x128xi1> to vector<8x128xi32>
    %41 = arith.sitofp %40 : vector<8x128xi32> to vector<8x128xf32>
    %cst_17 = arith.constant dense<0.000000e+00> : vector<8x128xf32>
    %42 = tpu.matmul %35, %41, %cst_17 {dimension_numbers = #tpu.dot_dimension_numbers<[1], [0], [0], [1], [0, 0, 1, 1], [], []>} : vector<8x8xf32>, vector<8x128xf32>, vector<8x128xf32> -> vector<8x128xf32>
    %c0_18 = arith.constant 0 : index
    %c0_19 = arith.constant 0 : index
    %43 = vector.load %arg6[%c0_18, %c0_19] : memref<8x128xf32, #tpu.memory_space<vmem>>, vector<8x128xf32>
    tpu.vector_store %arg6[%c0_18, %c0_19], %42 {strides = array<i32>} : memref<8x128xf32, #tpu.memory_space<vmem>>, vector<8x128xf32>,
    %44 = tpu.iota {dimensions = array<i32: 1>} : vector<8x128xi32>
    %c4_i32 = arith.constant 4 : i32
    %45 = vector.broadcast %c4_i32 : i32 to vector<8x128xi32>
    %46 = arith.cmpi slt, %44, %45 : vector<8x128xi32>
    %cst_20 = arith.constant -3.40282347E+38 : f32
    %47 = vector.broadcast %cst_20 : f32 to vector<8x128xf32>
    %48 = arith.select %46, %42, %47 : vector<8x128xi1>, vector<8x128xf32>
    %cst_21 = arith.constant dense<0xFF800000> : vector<8xf32>
    %49 = vector.multi_reduction <maximumf>, %48, %cst_21 [1] : vector<8x128xf32> to vector<8xf32>
    %50 = vector.shape_cast %49 : vector<8xf32> to vector<8x1xf32>
    %51 = vector.broadcast %50 : vector<8x1xf32> to vector<8x128xf32>
    %52 = arith.subf %48, %51 : vector<8x128xf32>
    %53 = math.exp %52 : vector<8x128xf32>
    %cst_22 = arith.constant dense<0.000000e+00> : vector<8xf32>
    %54 = vector.multi_reduction <add>, %53, %cst_22 [1] : vector<8x128xf32> to vector<8xf32>
    %55 = vector.shape_cast %54 : vector<8xf32> to vector<8x1xf32>
    %56 = math.log %55 : vector<8x1xf32>
    %57 = arith.addf %56, %50 : vector<8x1xf32>
    %c0_23 = arith.constant 0 : index
    %c0_24 = arith.constant 0 : index
    %58 = vector.load %arg5[%c0_23, %c0_24] : memref<8x1xi32, #tpu.memory_space<vmem>>, vector<8x1xi32>
    %59 = vector.broadcast %58 : vector<8x1xi32> to vector<8x128xi32>
    %60 = arith.cmpi eq, %44, %59 : vector<8x128xi32>
    %61 = arith.extui %60 : vector<8x128xi1> to vector<8x128xi32>
    %62 = arith.sitofp %61 : vector<8x128xi32> to vector<8x128xf32>
    %63 = arith.mulf %42, %62 : vector<8x128xf32>
    %cst_25 = arith.constant dense<0.000000e+00> : vector<8xf32>
    %64 = vector.multi_reduction <add>, %63, %cst_25 [1] : vector<8x128xf32> to vector<8xf32>
    %65 = vector.shape_cast %64 : vector<8xf32> to vector<8x1xf32>
    %66 = arith.subf %57, %65 : vector<8x1xf32>
    %67 = vector.shape_cast %66 : vector<8x1xf32> to vector<1x8x1xf32>
    %cst_26 = arith.constant dense<0.000000e+00> : vector<1xf32>
    %68 = vector.multi_reduction <add>, %67, %cst_26 [1, 2] : vector<1x8x1xf32> to vector<1xf32>
    %69 = vector.shape_cast %68 : vector<1xf32> to vector<1x1x1xf32>
    %70 = vector.extract %69[0, 0, 0] : f32 from vector<1x1x1xf32>
    %cst_27 = arith.constant 1.250000e-01 : f32
    %71 = arith.mulf %70, %cst_27 : f32
    %c0_28 = arith.constant 0 : index
    %c0_29 = arith.constant 0 : index
    %72 = memref.load %arg7[%c0_28, %c0_29] : memref<1x1xf32, #tpu.memory_space<smem>>
    memref.store %71, %arg7[%c0_28, %c0_29] : memref<1x1xf32, #tpu.memory_space<smem>>
    return
  }
}

</mosaic_0001>

<llo_original>
// kernel: tpu_custom_call.1
$region0: #{tpu_custom_call.1}
  #allocation0 [shape = 'u32[]', space=smem, size = 0x4, offset = 0x4, fixed_abs, tag = 'smem constant byte address 0x4 - core index']
  #allocation1 [shape = 'u32[144,128]{1,0:T(1,128)}', space=vmem, size = 0x12000, scoped, tag = 'internal scratch']
  %s0 = inlined_call_operand.vmem [shape: f32[8,256], index: 0, kind: input, shape index: {}]
  %s1 = inlined_call_operand.hbm [shape: f32[8,256], index: 1, kind: input, shape index: {}]
  %s2 = inlined_call_operand.hbm [shape: f32[256,128], index: 2, kind: input, shape index: {}]
  %s3 = inlined_call_operand.vmem [shape: f32[1,128], index: 3, kind: input, shape index: {}]
  %s4 = inlined_call_operand.vmem [shape: s32[8,1], index: 4, kind: input, shape index: {}]
  %s5 = inlined_call_operand.vmem [shape: s32[8,1], index: 5, kind: input, shape index: {}]
  %s6 = inlined_call_operand.hbm [shape: f32[8,128], index: 6, kind: output, shape index: {0}]
  %s7 = inlined_call_operand.hbm [shape: f32[1,1], index: 7, kind: output, shape index: {1}]
  %8 = xla_tuple %s6, %s7
  %s9 = sld [smem:[#allocation0]]
  $region50: #{tpu_custom_call.1} parent=0
    _
  %s11 = ssub.s32 1, %s9
  %s12 = scalar_select 0, %s11, %s9
  $region1: #{tpu_custom_call.1} parent=0
    #allocation2 [shape = 'u8[8192]{0}', space=vmem, size = 0x2000, scoped, tag = 'input window, operand 1, single buffered']
    #allocation3 [shape = 's32[1]{0}', space=sflag, size = 0x4, scoped, tag = 'scoped memory for tpu_custom_call.1']
    #allocation4 [shape = 's32[1]{0}', space=sflag, size = 0x4, scoped, tag = 'scoped memory for tpu_custom_call.1']
    #allocation5 [shape = 's32[1]{0}', space=sflag, size = 0x4, scoped, tag = 'scoped memory for tpu_custom_call.1']
    #allocation6 [shape = 'u8[131072]{0}', space=vmem, size = 0x20000, scoped, tag = 'input window, operand 2, single buffered']
    #allocation7 [shape = 's32[1]{0}', space=sflag, size = 0x4, scoped, tag = 'scoped memory for tpu_custom_call.1']
    #allocation8 [shape = 'u8[4096]{0}', space=vmem, size = 0x1000, scoped, tag = 'output window, operand 0, single buffered']
    #allocation9 [shape = 'u8[512]{0}', space=smem, size = 0x200, scoped, tag = 'output window, operand 1, single buffered']
    %13 = vsyncpa [#allocation3], 0
    %14 = vsyncpa [#allocation7], 0
    %15 = vsyncpa [#allocation4], 0
    %16 = vsyncpa [#allocation5], 0
    // Predicated region
    $region2: #{tpu_custom_call.1} parent=1 // pred_check
      _
    $region3: #{tpu_custom_call.1} parent=1 // pred_check_branch
      %18 = sbr.rel (0) target = $region5
    $region4: #{tpu_custom_call.1} parent=1 // pred_region
      _
    $region5: #{tpu_custom_call.1} parent=1 // pred_fallthru
      _
    // Predicated region
    $region6: #{tpu_custom_call.1} parent=1 // pred_check
      _
    $region7: #{tpu_custom_call.1} parent=1 // pred_check_branch
      %20 = sbr.rel (0) target = $region9
    $region8: #{tpu_custom_call.1} parent=1 // pred_region
      %s22 = ssub.s32 256, 256
      %23 = vsyncadd [#allocation3], %s22
      %s25 = sshll.u32 [#allocation2], 4
      %s26 = int_to_ptr.vmem [resolvable:$true] %s25
      %28 = dma.hbm_to_vmem [thread:$0]  %s1, 256, %s26, [#allocation3]
    $region9: #{tpu_custom_call.1} parent=1 // pred_fallthru
      _
    // Predicated region
    $region10: #{tpu_custom_call.1} parent=1 // pred_check
      _
    $region11: #{tpu_custom_call.1} parent=1 // pred_check_branch
      %30 = sbr.rel (0) target = $region13
    $region12: #{tpu_custom_call.1} parent=1 // pred_region
      %s32 = ssub.s32 4096, 4096
      %33 = vsyncadd [#allocation7], %s32
      %s34 = sshll.u32 [#allocation6], 4
      %s35 = int_to_ptr.vmem [resolvable:$true] %s34
      %40 = dma.hbm_to_vmem [thread:$0]  %s2, 4096, %s35, [#allocation7], 128, 128, 8
    $region13: #{tpu_custom_call.1} parent=1 // pred_fallthru
      _
    // Predicated region
    $region14: #{tpu_custom_call.1} parent=1 // pred_check
      _
    $region15: #{tpu_custom_call.1} parent=1 // pred_check_branch
      %42 = sbr.rel (0) target = $region17
    $region16: #{tpu_custom_call.1} parent=1 // pred_region
      _
    $region17: #{tpu_custom_call.1} parent=1 // pred_fallthru
      _
    // Predicated region
    $region18: #{tpu_custom_call.1} parent=1 // pred_check
      _
    $region19: #{tpu_custom_call.1} parent=1 // pred_check_branch
      %44 = sbr.rel (0) target = $region21
    $region20: #{tpu_custom_call.1} parent=1 // pred_region
      _
    $region21: #{tpu_custom_call.1} parent=1 // pred_fallthru
      _
    // Predicated region
    $region22: #{tpu_custom_call.1} parent=1 // pred_check
      _
    $region23: #{tpu_custom_call.1} parent=1 // pred_check_branch
      %46 = sbr.rel (0) target = $region25
    $region24: #{tpu_custom_call.1} parent=1 // pred_region
      _
    $region25: #{tpu_custom_call.1} parent=1 // pred_fallthru
      _
    // Predicated region
    $region26: #{tpu_custom_call.1} parent=1 // pred_check
      _
    $region27: #{tpu_custom_call.1} parent=1 // pred_check_branch
      %48 = sbr.rel (0) target = $region29
    $region28: #{tpu_custom_call.1} parent=1 // pred_region
      %49 = dma.done [#allocation3], 256
    $region29: #{tpu_custom_call.1} parent=1 // pred_fallthru
      _
    // Predicated region
    $region30: #{tpu_custom_call.1} parent=1 // pred_check
      _
    $region31: #{tpu_custom_call.1} parent=1 // pred_check_branch
      %51 = sbr.rel (0) target = $region33
    $region32: #{tpu_custom_call.1} parent=1 // pred_region
      %52 = dma.done [#allocation7], 4096
    $region33: #{tpu_custom_call.1} parent=1 // pred_fallthru
      _
    %v53 = vld [vmem:[#allocation6] sm:$0xff]
    %v54 = vld [vmem:[#allocation6 + $0x8] sm:$0xff]
    %v55 = vld [vmem:[#allocation6 + $0x10] sm:$0xff]
    %v56 = vld [vmem:[#allocation6 + $0x18] sm:$0xff]
    %v57 = vld [vmem:[#allocation6 + $0x20] sm:$0xff]
    %v58 = vld [vmem:[#allocation6 + $0x28] sm:$0xff]
    %v59 = vld [vmem:[#allocation6 + $0x30] sm:$0xff]
    %v60 = vld [vmem:[#allocation6 + $0x38] sm:$0xff]
    %v61 = vld [vmem:[#allocation6 + $0x40] sm:$0xff]
    %v62 = vld [vmem:[#allocation6 + $0x48] sm:$0xff]
    %v63 = vld [vmem:[#allocation6 + $0x50] sm:$0xff]
    %v64 = vld [vmem:[#allocation6 + $0x58] sm:$0xff]
    %v65 = vld [vmem:[#allocation6 + $0x60] sm:$0xff]
    %v66 = vld [vmem:[#allocation6 + $0x68] sm:$0xff]
    %v67 = vld [vmem:[#allocation6 + $0x70] sm:$0xff]
    %v68 = vld [vmem:[#allocation6 + $0x78] sm:$0xff]
    %v69 = vld [vmem:[#allocation6 + $0x80] sm:$0xff]
    %v70 = vld [vmem:[#allocation6 + $0x88] sm:$0xff]
    %v71 = vld [vmem:[#allocation6 + $0x90] sm:$0xff]
    %v72 = vld [vmem:[#allocation6 + $0x98] sm:$0xff]
    %v73 = vld [vmem:[#allocation6 + $0xa0] sm:$0xff]
    %v74 = vld [vmem:[#allocation6 + $0xa8] sm:$0xff]
    %v75 = vld [vmem:[#allocation6 + $0xb0] sm:$0xff]
    %v76 = vld [vmem:[#allocation6 + $0xb8] sm:$0xff]
    %v77 = vld [vmem:[#allocation6 + $0xc0] sm:$0xff]
    %v78 = vld [vmem:[#allocation6 + $0xc8] sm:$0xff]
    %v79 = vld [vmem:[#allocation6 + $0xd0] sm:$0xff]
    %v80 = vld [vmem:[#allocation6 + $0xd8] sm:$0xff]
    %v81 = vld [vmem:[#allocation6 + $0xe0] sm:$0xff]
    %v82 = vld [vmem:[#allocation6 + $0xe8] sm:$0xff]
    %v83 = vld [vmem:[#allocation6 + $0xf0] sm:$0xff]
    %v84 = vld [vmem:[#allocation6 + $0xf8] sm:$0xff]
    %v85 = vld [vmem:[%s3] sm:$0x1]
    %v86 = vld [vmem:[%s0] sm:$0xff]
    %v87 = vld [vmem:[%s0 + $0x8] sm:$0xff]
    %v89 = vlaneseq
    %v90 = vshrl.u32 %v89, 7
    %v91 = vsub.s32 0, %v90
    %v92 = vrot.slane %v85, %v91
    %94 = vmatprep.subr.mxu0 0.0
    %95 = vmatpush1.msra.mxu0 %v53
    %96 = vmatprep.subr.mxu0 0.0
    %97 = vmatpush1.msra.mxu0 %v54
    %98 = vmatprep.subr.mxu0 0.0
    %99 = vmatpush1.msra.mxu0 %v55
    %100 = vmatprep.subr.mxu0 0.0
    %101 = vmatpush1.msra.mxu0 %v56
    %102 = vmatprep.subr.mxu0 0.0
    %103 = vmatpush1.msra.mxu0 %v57
    %104 = vmatprep.subr.mxu0 0.0
    %105 = vmatpush1.msra.mxu0 %v58
    %106 = vmatprep.subr.mxu0 0.0
    %107 = vmatpush1.msra.mxu0 %v59
    %108 = vmatprep.subr.mxu0 0.0
    %109 = vmatpush1.msra.mxu0 %v60
    %110 = vmatprep.subr.mxu0 0.0
    %111 = vmatpush1.msra.mxu0 %v61
    %112 = vmatprep.subr.mxu0 0.0
    %113 = vmatpush1.msra.mxu0 %v62
    %114 = vmatprep.subr.mxu0 0.0
    %115 = vmatpush1.msra.mxu0 %v63
    %116 = vmatprep.subr.mxu0 0.0
    %117 = vmatpush1.msra.mxu0 %v64
    %118 = vmatprep.subr.mxu0 0.0
    %119 = vmatpush1.msra.mxu0 %v65
    %120 = vmatprep.subr.mxu0 0.0
    %121 = vmatpush1.msra.mxu0 %v66
    %122 = vmatprep.subr.mxu0 0.0
    %123 = vmatpush1.msra.mxu0 %v67
    %124 = vmatprep.subr.mxu0 0.0
    %125 = vmatpush1.msra.mxu0 %v68
    %126 = vmatprep.subr.mxu0 0.0
    %127 = vmatpush1.msra.mxu0 %v69
    %128 = vmatprep.subr.mxu0 0.0
    %129 = vmatpush1.msra.mxu0 %v70
    %130 = vmatprep.subr.mxu0 0.0
    %131 = vmatpush1.msra.mxu0 %v71
    %132 = vmatprep.subr.mxu0 0.0
    %133 = vmatpush1.msra.mxu0 %v72
    %134 = vmatprep.subr.mxu0 0.0
    %135 = vmatpush1.msra.mxu0 %v73
    %136 = vmatprep.subr.mxu0 0.0
    %137 = vmatpush1.msra.mxu0 %v74
    %138 = vmatprep.subr.mxu0 0.0
    %139 = vmatpush1.msra.mxu0 %v75
    %140 = vmatprep.subr.mxu0 0.0
    %141 = vmatpush1.msra.mxu0 %v76
    %142 = vmatprep.subr.mxu0 0.0
    %143 = vmatpush1.msra.mxu0 %v77
    %144 = vmatprep.subr.mxu0 0.0
    %145 = vmatpush1.msra.mxu0 %v78
    %146 = vmatprep.subr.mxu0 0.0
    %147 = vmatpush1.msra.mxu0 %v79
    %148 = vmatprep.subr.mxu0 0.0
    %149 = vmatpush1.msra.mxu0 %v80
    %150 = vmatprep.subr.mxu0 0.0
    %151 = vmatpush1.msra.mxu0 %v81
    %152 = vmatprep.subr.mxu0 0.0
    %153 = vmatpush1.msra.mxu0 %v82
    %154 = vmatprep.subr.mxu0 0.0
    %155 = vmatpush1.msra.mxu0 %v83
    %156 = vmatprep.subr.mxu0 0.0
    %157 = vmatpush1.msra.mxu0 %v84
    %158 = vmatprep.mubr.f32.mxu0 %v87
    %159 = vmatmul.mubr.f32.gmra.mrb[0].mxu0 %v86
    %v160 = vpop.f32.mrb[0].mxu0
    %v161 = vadd.f32 %v92, %v160
    %v162 = vpop.f32.mrb[0].mxu0
    %163 = vdwg.mxu0
    %v164 = vld [vmem:[#allocation2] sm:$0xff]
    %v165 = vld [vmem:[#allocation2 + $0x8] sm:$0xff]
    %166 = vmatprep.subr.mxu0 0.0
    %167 = vmatpush1.msra.mxu0 %v53
    %168 = vmatprep.subr.mxu0 0.0
    %169 = vmatpush1.msra.mxu0 %v54
    %170 = vmatprep.subr.mxu0 0.0
    %171 = vmatpush1.msra.mxu0 %v55
    %172 = vmatprep.subr.mxu0 0.0
    %173 = vmatpush1.msra.mxu0 %v56
    %174 = vmatprep.subr.mxu0 0.0
    %175 = vmatpush1.msra.mxu0 %v57
    %176 = vmatprep.subr.mxu0 0.0
    %177 = vmatpush1.msra.mxu0 %v58
    %178 = vmatprep.subr.mxu0 0.0
    %179 = vmatpush1.msra.mxu0 %v59
    %180 = vmatprep.subr.mxu0 0.0
    %181 = vmatpush1.msra.mxu0 %v60
    %182 = vmatprep.subr.mxu0 0.0
    %183 = vmatpush1.msra.mxu0 %v61
    %184 = vmatprep.subr.mxu0 0.0
    %185 = vmatpush1.msra.mxu0 %v62
    %186 = vmatprep.subr.mxu0 0.0
    %187 = vmatpush1.msra.mxu0 %v63
    %188 = vmatprep.subr.mxu0 0.0
    %189 = vmatpush1.msra.mxu0 %v64
    %190 = vmatprep.subr.mxu0 0.0
    %191 = vmatpush1.msra.mxu0 %v65
    %192 = vmatprep.subr.mxu0 0.0
    %193 = vmatpush1.msra.mxu0 %v66
    %194 = vmatprep.subr.mxu0 0.0
    %195 = vmatpush1.msra.mxu0 %v67
    %196 = vmatprep.subr.mxu0 0.0
    %197 = vmatpush1.msra.mxu0 %v68
    %198 = vmatprep.subr.mxu0 0.0
    %199 = vmatpush1.msra.mxu0 %v69
    %200 = vmatprep.subr.mxu0 0.0
    %201 = vmatpush1.msra.mxu0 %v70
    %202 = vmatprep.subr.mxu0 0.0
    %203 = vmatpush1.msra.mxu0 %v71
    %204 = vmatprep.subr.mxu0 0.0
    %205 = vmatpush1.msra.mxu0 %v72
    %206 = vmatprep.subr.mxu0 0.0
    %207 = vmatpush1.msra.mxu0 %v73
    %208 = vmatprep.subr.mxu0 0.0
    %209 = vmatpush1.msra.mxu0 %v74
    %210 = vmatprep.subr.mxu0 0.0
    %211 = vmatpush1.msra.mxu0 %v75
    %212 = vmatprep.subr.mxu0 0.0
    %213 = vmatpush1.msra.mxu0 %v76
    %214 = vmatprep.subr.mxu0 0.0
    %215 = vmatpush1.msra.mxu0 %v77
    %216 = vmatprep.subr.mxu0 0.0
    %217 = vmatpush1.msra.mxu0 %v78
    %218 = vmatprep.subr.mxu0 0.0
    %219 = vmatpush1.msra.mxu0 %v79
    %220 = vmatprep.subr.mxu0 0.0
    %221 = vmatpush1.msra.mxu0 %v80
    %222 = vmatprep.subr.mxu0 0.0
    %223 = vmatpush1.msra.mxu0 %v81
    %224 = vmatprep.subr.mxu0 0.0
    %225 = vmatpush1.msra.mxu0 %v82
    %226 = vmatprep.subr.mxu0 0.0
    %227 = vmatpush1.msra.mxu0 %v83
    %228 = vmatprep.subr.mxu0 0.0
    %229 = vmatpush1.msra.mxu0 %v84
    %230 = vmatprep.mubr.f32.mxu0 %v165
    %231 = vmatmul.mubr.f32.gmra.mrb[0].mxu0 %v164
    %v232 = vpop.f32.mrb[0].mxu0
    %v233 = vadd.f32 %v92, %v232
    %v234 = vpop.f32.mrb[0].mxu0
    %235 = vdwg.mxu0
    %v236 = vmul.f32 %v161, %v161
    %237 = vadd.xlane.f32.xlu0 %v236
    %v238 = vpop.xlane.xlu0 %237
    %v239 = vmax.f32 %v238, 1e-16
    %v240 = vrsqrt.pop %v239
    %v241 = vmul.f32 %v161, %v240
    %v242 = vmul.f32 %v233, %v233
    %243 = vadd.xlane.f32.xlu0 %v242
    %v244 = vpop.xlane.xlu0 %243
    %v245 = vmax.f32 %v244, 1e-16
    %v246 = vrsqrt.pop %v245
    %v247 = vmul.f32 %v233, %v246
    %248 = vmatprep.subr.mxu0 0.0
    %249 = vmatpush1.xpose.msra.mxu0 %v241
    %250 = vmatprep.subr.mxu0 0.0
    %251 = vmatpush1.xpose.msra.mxu0 0.0
    %252 = vmatprep.subr.mxu0 0.0
    %253 = vmatpush1.xpose.msra.mxu0 0.0
    %254 = vmatprep.subr.mxu0 0.0
    %255 = vmatpush1.xpose.msra.mxu0 0.0
    %256 = vmatprep.subr.mxu0 0.0
    %257 = vmatpush1.xpose.msra.mxu0 0.0
    %258 = vmatprep.subr.mxu0 0.0
    %259 = vmatpush1.xpose.msra.mxu0 0.0
    %260 = vmatprep.subr.mxu0 0.0
    %261 = vmatpush1.xpose.msra.mxu0 0.0
    %262 = vmatprep.subr.mxu0 0.0
    %263 = vmatpush1.xpose.msra.mxu0 0.0
    %264 = vmatprep.subr.mxu0 0.0
    %265 = vmatpush1.xpose.msra.mxu0 0.0
    %266 = vmatprep.subr.mxu0 0.0
    %267 = vmatpush1.xpose.msra.mxu0 0.0
    %268 = vmatprep.subr.mxu0 0.0
    %269 = vmatpush1.xpose.msra.mxu0 0.0
    %270 = vmatprep.subr.mxu0 0.0
    %271 = vmatpush1.xpose.msra.mxu0 0.0
    %272 = vmatprep.subr.mxu0 0.0
    %273 = vmatpush1.xpose.msra.mxu0 0.0
    %274 = vmatprep.subr.mxu0 0.0
    %275 = vmatpush1.xpose.msra.mxu0 0.0
    %276 = vmatprep.subr.mxu0 0.0
    %277 = vmatpush1.xpose.msra.mxu0 0.0
    %278 = vmatprep.subr.mxu0 0.0
    %279 = vmatpush1.xpose.msra.mxu0 0.0
    %280 = vmatprep.subr.mxu0 0.0
    %281 = vmatpush1.xpose.msra.mxu0 0.0
    %282 = vmatprep.subr.mxu0 0.0
    %283 = vmatpush1.xpose.msra.mxu0 0.0
    %284 = vmatprep.subr.mxu0 0.0
    %285 = vmatpush1.xpose.msra.mxu0 0.0
    %286 = vmatprep.subr.mxu0 0.0
    %287 = vmatpush1.xpose.msra.mxu0 0.0
    %288 = vmatprep.subr.mxu0 0.0
    %289 = vmatpush1.xpose.msra.mxu0 0.0
    %290 = vmatprep.subr.mxu0 0.0
    %291 = vmatpush1.xpose.msra.mxu0 0.0
    %292 = vmatprep.subr.mxu0 0.0
    %293 = vmatpush1.xpose.msra.mxu0 0.0
    %294 = vmatprep.subr.mxu0 0.0
    %295 = vmatpush1.xpose.msra.mxu0 0.0
    %296 = vmatprep.subr.mxu0 0.0
    %297 = vmatpush1.xpose.msra.mxu0 0.0
    %298 = vmatprep.subr.mxu0 0.0
    %299 = vmatpush1.xpose.msra.mxu0 0.0
    %300 = vmatprep.subr.mxu0 0.0
    %301 = vmatpush1.xpose.msra.mxu0 0.0
    %302 = vmatprep.subr.mxu0 0.0
    %303 = vmatpush1.xpose.msra.mxu0 0.0
    %304 = vmatprep.subr.mxu0 0.0
    %305 = vmatpush1.xpose.msra.mxu0 0.0
    %306 = vmatprep.subr.mxu0 0.0
    %307 = vmatpush1.xpose.msra.mxu0 0.0
    %308 = vmatprep.subr.mxu0 0.0
    %309 = vmatpush1.xpose.msra.mxu0 0.0
    %310 = vmatprep.subr.mxu0 0.0
    %311 = vmatpush1.xpose.msra.mxu0 0.0
    %312 = vmatprep.mubr.f32.mxu0 0.0
    %313 = vmatmul.mubr.f32.gmra.mrb[0].mxu0 %v247
    %v314 = vpop.f32.mrb[0].mxu0
    %v315 = vadd.f32 0.0, %v314
    %v316 = vpop.f32.mrb[0].mxu0
    %317 = vdwg.mxu0
    %vm318 = vcmask 64512
    %v319 = vsel %vm318, %v315, -inf
    %320 = vmax.xlane.f32.xlu0 %v319
    %v321 = vpop.xlane.xlu0 %320
    %v322 = vsub.f32 %v315, %v321
    %v323 = vmul.f32 %v322, 1.442695
    %v324 = vpow.pop %v323
    %v325 = vsel %vm318, %v324, 0.0
    %326 = vadd.xlane.f32.xlu0 %v325
    %v327 = vpop.xlane.xlu0 %326
    %v328 = vrcp.pop %v327
    %v329 = vmul.f32 %v324, %v328
    %v330 = vlaneseq
    %v331 = vand.u32 %v330, 127
    %v332 = vld [vmem:[%s4] sm:$0xff]
    %333 = vset.pattern.permute.xlu0 0
    %334 = vperm.xlu0 %333, %v332
    %v335 = vpop.permute.xlu0 %334
    %vm336 = vcmp.eq.s32.totalorder %v331, %v335
    %v337 = vsel %vm336, 1, 0
    %v338 = vcvt.s32.f32 %v337
    %v340 = vsel %vm318, %v329, 0
    %342 = vmatprep.subr.mxu0 0.0
    %343 = vmatpush1.msra.mxu0 %v338
    %344 = vmatprep.subr.mxu0 0.0
    %345 = vmatpush1.msra.mxu0 0.0
    %346 = vmatprep.subr.mxu0 0.0
    %347 = vmatpush1.msra.mxu0 0.0
    %348 = vmatprep.subr.mxu0 0.0
    %349 = vmatpush1.msra.mxu0 0.0
    %350 = vmatprep.subr.mxu0 0.0
    %351 = vmatpush1.msra.mxu0 0.0
    %352 = vmatprep.subr.mxu0 0.0
    %353 = vmatpush1.msra.mxu0 0.0
    %354 = vmatprep.subr.mxu0 0.0
    %355 = vmatpush1.msra.mxu0 0.0
    %356 = vmatprep.subr.mxu0 0.0
    %357 = vmatpush1.msra.mxu0 0.0
    %358 = vmatprep.subr.mxu0 0.0
    %359 = vmatpush1.msra.mxu0 0.0
    %360 = vmatprep.subr.mxu0 0.0
    %361 = vmatpush1.msra.mxu0 0.0
    %362 = vmatprep.subr.mxu0 0.0
    %363 = vmatpush1.msra.mxu0 0.0
    %364 = vmatprep.subr.mxu0 0.0
    %365 = vmatpush1.msra.mxu0 0.0
    %366 = vmatprep.subr.mxu0 0.0
    %367 = vmatpush1.msra.mxu0 0.0
    %368 = vmatprep.subr.mxu0 0.0
    %369 = vmatpush1.msra.mxu0 0.0
    %370 = vmatprep.subr.mxu0 0.0
    %371 = vmatpush1.msra.mxu0 0.0
    %372 = vmatprep.subr.mxu0 0.0
    %373 = vmatpush1.msra.mxu0 0.0
    %374 = vmatprep.subr.mxu0 0.0
    %375 = vmatpush1.msra.mxu0 0.0
    %376 = vmatprep.subr.mxu0 0.0
    %377 = vmatpush1.msra.mxu0 0.0
    %378 = vmatprep.subr.mxu0 0.0
    %379 = vmatpush1.msra.mxu0 0.0
    %380 = vmatprep.subr.mxu0 0.0
    %381 = vmatpush1.msra.mxu0 0.0
    %382 = vmatprep.subr.mxu0 0.0
    %383 = vmatpush1.msra.mxu0 0.0
    %384 = vmatprep.subr.mxu0 0.0
    %385 = vmatpush1.msra.mxu0 0.0
    %386 = vmatprep.subr.mxu0 0.0
    %387 = vmatpush1.msra.mxu0 0.0
    %388 = vmatprep.subr.mxu0 0.0
    %389 = vmatpush1.msra.mxu0 0.0
    %390 = vmatprep.subr.mxu0 0.0
    %391 = vmatpush1.msra.mxu0 0.0
    %392 = vmatprep.subr.mxu0 0.0
    %393 = vmatpush1.msra.mxu0 0.0
    %394 = vmatprep.subr.mxu0 0.0
    %395 = vmatpush1.msra.mxu0 0.0
    %396 = vmatprep.subr.mxu0 0.0
    %397 = vmatpush1.msra.mxu0 0.0
    %398 = vmatprep.subr.mxu0 0.0
    %399 = vmatpush1.msra.mxu0 0.0
    %400 = vmatprep.subr.mxu0 0.0
    %401 = vmatpush1.msra.mxu0 0.0
    %402 = vmatprep.subr.mxu0 0.0
    %403 = vmatpush1.msra.mxu0 0.0
    %404 = vmatprep.subr.mxu0 0.0
    %405 = vmatpush1.msra.mxu0 0.0
    %406 = vmatprep.mubr.f32.mxu0 0.0
    %407 = vmatmul.mubr.f32.gmra.mrb[0].mxu0 %v340
    %v408 = vpop.f32.mrb[0].mxu0
    %v409 = vadd.f32 0.0, %v408
    %v410 = vpop.f32.mrb[0].mxu0
    %411 = vdwg.mxu0
    %412 = vst [vmem:[#allocation8] sm:$0xff] %v409
    %vm413 = vcmp.lt.s32.totalorder %v331, 4
    %v414 = vsel %vm413, %v409, -3.4028235e+38
    %415 = vmax.xlane.f32.xlu0 %v414
    %v416 = vpop.xlane.xlu0 %415
    %v417 = vsub.f32 %v414, %v416
    %v418 = vmul.f32 %v417, 1.442695
    %v419 = vpow.pop %v418
    %420 = vadd.xlane.f32.xlu0 %v419
    %v421 = vpop.xlane.xlu0 %420
    %v422 = vlog2.pop %v421
    %v423 = vmul.f32 %v422, 0.6931472
    %v424 = vadd.f32 %v423, %v416
    %v425 = vld [vmem:[%s5] sm:$0xff]
    %426 = vset.pattern.permute.xlu0 0
    %427 = vperm.xlu0 %426, %v425
    %v428 = vpop.permute.xlu0 %427
    %vm429 = vcmp.eq.s32.totalorder %v331, %v428
    %v430 = vsel %vm429, 1, 0
    %v431 = vcvt.s32.f32 %v430
    %v432 = vmul.f32 %v409, %v431
    %433 = vadd.xlane.f32.xlu0 %v432
    %v434 = vpop.xlane.xlu0 %433
    %v435 = vsub.f32 %v424, %v434
    %vm436 = vcmask 7168
    %v437 = vsel %vm436, %v435, 0.0
    %438 = vadd.xlane.f32.xlu0 %v437
    %v439 = vpop.xlane.xlu0 %438
    %v440 = vrot.slane %v439, 4
    %v441 = vadd.f32 %v439, %v440
    %v442 = vrot.slane %v441, 2
    %v443 = vadd.f32 %v441, %v442
    %v444 = vrot.slane %v443, 1
    %v445 = vadd.f32 %v443, %v444
    %s446 = vtos %v445
    %s447 = smul.f32 %s446, 0.125
    %s448 = scalar_lea.smem [#allocation9], 0
    %449 = sst [smem:[%s448]] %s447
    // Predicated region
    $region34: #{tpu_custom_call.1} parent=1 // pred_check
      _
    $region35: #{tpu_custom_call.1} parent=1 // pred_check_branch
      %451 = sbr.rel (0) target = $region37
    $region36: #{tpu_custom_call.1} parent=1 // pred_region
      %s453 = ssub.s32 128, 128
      %454 = vsyncadd [#allocation4], %s453
      %s456 = sshll.u32 [#allocation8], 4
      %s457 = int_to_ptr.vmem [resolvable:$true] %s456
      %459 = dma.vmem_to_hbm [thread:$0]  %s457, 128, %s6, [#allocation4]
    $region37: #{tpu_custom_call.1} parent=1 // pred_fallthru
      _
    // Predicated region
    $region38: #{tpu_custom_call.1} parent=1 // pred_check
      _
    $region39: #{tpu_custom_call.1} parent=1 // pred_check_branch
      %461 = sbr.rel (0) target = $region41
    $region40: #{tpu_custom_call.1} parent=1 // pred_region
      %s463 = ssub.s32 16, 16
      %464 = vsyncadd [#allocation5], %s463
      %467 = dma.smem_to_hbm [#allocation9], 16, %s7, [#allocation5]
    $region41: #{tpu_custom_call.1} parent=1 // pred_fallthru
      _
    // Predicated region
    $region42: #{tpu_custom_call.1} parent=1 // pred_check
      _
    $region43: #{tpu_custom_call.1} parent=1 // pred_check_branch
      %469 = sbr.rel (0) target = $region45
    $region44: #{tpu_custom_call.1} parent=1 // pred_region
      %470 = dma.done [#allocation4], 128
    $region45: #{tpu_custom_call.1} parent=1 // pred_fallthru
      _
    // Predicated region
    $region46: #{tpu_custom_call.1} parent=1 // pred_check
      _
    $region47: #{tpu_custom_call.1} parent=1 // pred_check_branch
      %472 = sbr.rel (0) target = $region49
    $region48: #{tpu_custom_call.1} parent=1 // pred_region
      %473 = dma.done [#allocation5], 16
    $region49: #{tpu_custom_call.1} parent=1 // pred_fallthru
      _
    %474 = sfence
    %475 = vsyncpa [#allocation3], 1
    %476 = vsyncpa [#allocation7], 1
    %477 = vsyncpa [#allocation4], 1
    %478 = vsyncpa [#allocation5], 1

</llo_original>
